<compile_context>
chip_gen: v6e
topology: v6e:2x2x1
jax: 0.10.0
libtpu: 0.0.40
codegen_flags: <defaults>
</compile_context>

<pallas_src>
import functools

import jax
import jax.numpy as jnp
from jax.experimental import pallas as pl
from jax.experimental.pallas import tpu as pltpu

LANE = 128  # padded feature/lane dimension


def mlp_kernel(x_ref, params_ref, o_ref):
    # x_ref:      (Bpad, 128)     padded input; 1.0 in column `inDim` (bias column)
    # params_ref: (2, 128, 128)   [0] = W1 with b1 folded, [1] = W2 with 2*b2 folded
    # o_ref:      (Bpad, 128)     padded output; real data lives in [:B, :outDim]
    x = x_ref[...]
    w1 = params_ref[0]
    w2 = params_ref[1]
    h = jax.nn.sigmoid(jnp.dot(x, w1, preferred_element_type=jnp.float32))
    y = jax.nn.sigmoid(jnp.dot(h, w2, preferred_element_type=jnp.float32))
    o_ref[...] = y.astype(o_ref.dtype)


def pack_params(w1, b1, w2, b2):
    """Fold biases into zero-padded (128, 128) weight slabs; return (2, 128, 128).

    Called ONCE at init (hoisted out of the per-forward path per perf review).
    """
    inDim, h1Dim = w1.shape
    outDim = w2.shape[1]
    assert inDim + 1 <= LANE and h1Dim + 1 <= LANE and outDim <= LANE

    # Layer 1: x_pad carries a 1.0 in column `inDim`, so row `inDim` holds b1.
    w1_aug = jnp.zeros((LANE, LANE), jnp.float32)
    w1_aug = w1_aug.at[:inDim, :h1Dim].set(w1)
    w1_aug = w1_aug.at[inDim, :h1Dim].set(b1.reshape(-1))

    # Layer 2: padded hidden columns (>= h1Dim) have pre-activation exactly 0
    # (zero x-padding x zero W1 columns), so post-sigmoid they are exactly 0.5.
    # Put 2*b2 in row `h1Dim`: 0.5 * (2*b2) == b2 exactly in f32.
    w2_aug = jnp.zeros((LANE, LANE), jnp.float32)
    w2_aug = w2_aug.at[:h1Dim, :outDim].set(w2)
    w2_aug = w2_aug.at[h1Dim, :outDim].set(2.0 * b2.reshape(-1))

    return jnp.stack([w1_aug, w2_aug])  # (2, 128, 128)


@functools.partial(jax.jit, static_argnames=("in_dim", "h1_dim", "out_dim"))
def mlp_forward(x, params, *, in_dim, h1_dim, out_dim):
    """Jitted forward: pad -> fused pallas kernel -> slice, all one executable.

    x:      (B, in_dim) f32
    params: (2, 128, 128) f32 packed weight slab from pack_params() (built once at init)
    """
    B = x.shape[0]
    bpad = ((B + 7) // 8) * 8  # sublane-align the batch

    # Lane/sublane-dense padded input with an augmented-ones column folding b1.
    x_pad = jnp.zeros((bpad, LANE), jnp.float32)
    x_pad = x_pad.at[:B, :in_dim].set(x.astype(jnp.float32))
    x_pad = x_pad.at[:, in_dim].set(1.0)

    out_pad = pl.pallas_call(
        mlp_kernel,
        out_shape=jax.ShapeDtypeStruct((bpad, LANE), jnp.float32),
        in_specs=[
            pl.BlockSpec(memory_space=pltpu.MemorySpace.VMEM),
            pl.BlockSpec(memory_space=pltpu.MemorySpace.VMEM),
        ],
        out_specs=pl.BlockSpec(memory_space=pltpu.MemorySpace.VMEM),
        # Let XLA fuse the x padding directly into the kernel input (no HBM round trip).
        compiler_params=pltpu.CompilerParams(allow_input_fusion=[0]),
        # Tight estimate of the REAL (unpadded) work so XLA schedules neighbors correctly.
        cost_estimate=pl.CostEstimate(
            flops=2 * B * in_dim * h1_dim + 2 * B * h1_dim * out_dim,
            transcendentals=B * (h1_dim + out_dim),
            bytes_accessed=4 * (B * in_dim
                                + in_dim * h1_dim + h1_dim
                                + h1_dim * out_dim + out_dim
                                + B * out_dim),
        ),
    )(x_pad, params)

    # Strip batch / lane padding; fused into the same jitted executable.
    return out_pad[:B, :out_dim]


def init_linear_params(key, fan_in, fan_out):
    """Deterministic init mimicking PyTorch nn.Linear: U(-1/sqrt(fan_in), 1/sqrt(fan_in))."""
    kw, kb = jax.random.split(key)
    bound = 1.0 / jnp.sqrt(jnp.float32(fan_in))
    w = jax.random.uniform(kw, (fan_in, fan_out), jnp.float32, -bound, bound)  # pre-transposed
    b = jax.random.uniform(kb, (fan_out,), jnp.float32, -bound, bound)
    return w, b


if __name__ == "__main__":
    # Input matching the PyTorch script: 12 samples of 26 features.
    x = jnp.array(
        [[1.0, 1.0, 1.0, 1.0, 1.0, 1.0, 0.0, 0.0, 1.0, 0.0, 0.0, 0.0, 0.0, 1.0, 0.0, 0.0, 0.0, 0.0, 1.0, 0.0, 0.0, 0.0, 0.0, 1.0, 0.0, 0.0],
         [1.0, 1.0, 1.0, 1.0, 1.0, 0.0, 0.0, 0.0, 1.0, 0.0, 1.0, 0.0, 0.0, 1.0, 0.0, 0.0, 0.0, 0.0, 1.0, 0.0, 0.0, 0.0, 0.0, 1.0, 0.0, 0.0],
         [1.0, 0.0, 1.0, 1.0, 1.0, 1.0, 1.0, 0.0, 1.0, 0.0, 0.0, 0.0, 0.0, 1.0, 0.0, 0.0, 0.0, 0.0, 1.0, 0.0, 0.0, 0.0, 0.0, 1.0, 0.0, 0.0],
         [1.0, 1.0, 1.0, 1.0, 1.0, 1.0, 1.0, 0.0, 0.0, 0.0, 0.0, 1.0, 0.0, 0.0, 0.0, 0.0, 1.0, 0.0, 0.0, 0.0, 0.0, 1.0, 1.0, 1.0, 1.0, 1.0],
         [1.0, 1.0, 1.0, 1.0, 1.0, 0.0, 1.0, 0.0, 0.0, 0.0, 1.0, 1.0, 0.0, 0.0, 0.0, 0.0, 1.0, 0.0, 0.0, 0.0, 0.0, 1.0, 1.0, 1.0, 1.0, 1.0],
         [1.0, 1.0, 1.0, 1.0, 1.0, 1.0, 1.0, 0.0, 0.0, 0.0, 0.0, 1.0, 0.0, 0.0, 0.0, 0.0, 1.0, 0.0, 0.0, 0.0, 1.0, 1.0, 1.0, 1.0, 1.0, 0.0],
         [1.0, 1.0, 1.0, 1.0, 1.0, 1.0, 1.0, 0.0, 0.0, 0.0, 0.0, 1.0, 1.0, 1.0, 1.0, 1.0, 1.0, 0.0, 0.0, 0.0, 0.0, 1.0, 1.0, 1.0, 1.0, 1.0],
         [1.0, 0.5, 1.0, 1.0, 1.0, 1.0, 1.0, 0.0, 0.0, 0.0, 0.0, 1.0, 1.0, 1.0, 1.0, 1.0, 1.0, 0.0, 0.0, 0.0, 0.0, 1.0, 1.0, 1.0, 1.0, 1.0],
         [1.0, 1.0, 1.0, 1.0, 1.0, 1.0, 1.0, 0.0, 0.0, 0.0, 0.0, 1.0, 1.0, 1.0, 1.0, 1.0, 1.0, 0.0, 0.0, 0.0, 0.0, 0.5, 1.0, 1.0, 1.0, 1.0],
         [1.0, 1.0, 0.0, 0.0, 0.0, 0.0, 1.0, 0.0, 0.0, 0.0, 0.0, 1.0, 0.0, 0.0, 0.0, 0.0, 1.0, 0.0, 0.0, 0.0, 0.0, 1.0, 1.0, 1.0, 1.0, 1.0],
         [1.0, 1.0, 0.0, 0.0, 0.0, 0.0, 1.0, 0.0, 0.0, 0.0, 0.0, 1.0, 0.0, 0.0, 0.0, 0.0, 1.0, 0.0, 0.0, 0.0, 1.0, 1.0, 1.0, 1.0, 1.0, 0.0],
         [1.0, 1.0, 0.0, 0.0, 0.0, 0.0, 1.0, 0.0, 0.0, 0.0, 0.0, 1.0, 0.0, 0.0, 0.0, 0.0, 1.0, 0.0, 0.0, 0.0, 0.0, 0.3, 1.0, 1.0, 1.0, 1.0]],
        dtype=jnp.float32)

    inDim, h1Dim, outDim = 26, 32, 4

    key = jax.random.PRNGKey(0)
    k1, k2 = jax.random.split(key)
    w1, b1 = init_linear_params(k1, inDim, h1Dim)
    w2, b2 = init_linear_params(k2, h1Dim, outDim)

    # Build the fused weight slab ONCE (hoisted out of the forward path).
    params = jax.block_until_ready(pack_params(w1, b1, w2, b2))

    out = mlp_forward(x, params, in_dim=inDim, h1_dim=h1Dim, out_dim=outDim)
    out = jax.block_until_ready(out)

    # Pure-JAX reference check (forward semantics of the PyTorch module).
    ref = jax.nn.sigmoid(jax.nn.sigmoid(x @ w1 + b1) @ w2 + b2)
    assert out.shape == (x.shape[0], outDim)
    assert jnp.allclose(out, ref, atol=1e-5, rtol=1e-5)

    print("KERNEL_OK")
</pallas_src>

<mosaic_0001>
module attributes {stable_mosaic.version = 11 : i64} {
  func.func @mlp_kernel(%arg0: memref<16x128xf32, #tpu.memory_space<vmem>>, %arg1: memref<2x128x128xf32, #tpu.memory_space<vmem>>, %arg2: memref<16x128xf32, #tpu.memory_space<vmem>>) attributes {dimension_semantics = [], scalar_prefetch = 0 : i64, scratch_operands = 0 : i64, tpu.core_type = #tpu.core_type<tc>} {
    %c0 = arith.constant 0 : index
    %c0_0 = arith.constant 0 : index
    %0 = vector.load %arg0[%c0, %c0_0] : memref<16x128xf32, #tpu.memory_space<vmem>>, vector<16x128xf32>
    %c0_1 = arith.constant 0 : index
    %c0_2 = arith.constant 0 : index
    %c0_3 = arith.constant 0 : index
    %1 = vector.load %arg1[%c0_1, %c0_2, %c0_3] : memref<2x128x128xf32, #tpu.memory_space<vmem>>, vector<1x128x128xf32>
    %2 = vector.shape_cast %1 : vector<1x128x128xf32> to vector<128x128xf32>
    %c1 = arith.constant 1 : index
    %c0_4 = arith.constant 0 : index
    %c0_5 = arith.constant 0 : index
    %3 = vector.load %arg1[%c1, %c0_4, %c0_5] : memref<2x128x128xf32, #tpu.memory_space<vmem>>, vector<1x128x128xf32>
    %4 = vector.shape_cast %3 : vector<1x128x128xf32> to vector<128x128xf32>
    %cst = arith.constant dense<0.000000e+00> : vector<16x128xf32>
    %5 = tpu.matmul %0, %2, %cst {dimension_numbers = #tpu.dot_dimension_numbers<[1], [0], [0], [1], [0, 0, 1, 1], [], []>} : vector<16x128xf32>, vector<128x128xf32>, vector<16x128xf32> -> vector<16x128xf32>
    %6 = arith.negf %5 : vector<16x128xf32>
    %7 = math.exp %6 : vector<16x128xf32>
    %cst_6 = arith.constant 1.000000e+00 : f32
    %8 = vector.broadcast %cst_6 : f32 to vector<16x128xf32>
    %9 = arith.addf %8, %7 : vector<16x128xf32>
    %10 = arith.divf %8, %9 : vector<16x128xf32>
    %cst_7 = arith.constant dense<0.000000e+00> : vector<16x128xf32>
    %11 = tpu.matmul %10, %4, %cst_7 {dimension_numbers = #tpu.dot_dimension_numbers<[1], [0], [0], [1], [0, 0, 1, 1], [], []>} : vector<16x128xf32>, vector<128x128xf32>, vector<16x128xf32> -> vector<16x128xf32>
    %12 = arith.negf %11 : vector<16x128xf32>
    %13 = math.exp %12 : vector<16x128xf32>
    %cst_8 = arith.constant 1.000000e+00 : f32
    %14 = vector.broadcast %cst_8 : f32 to vector<16x128xf32>
    %15 = arith.addf %14, %13 : vector<16x128xf32>
    %16 = arith.divf %14, %15 : vector<16x128xf32>
    %c0_9 = arith.constant 0 : index
    %c0_10 = arith.constant 0 : index
    %17 = vector.load %arg2[%c0_9, %c0_10] : memref<16x128xf32, #tpu.memory_space<vmem>>, vector<16x128xf32>
    tpu.vector_store %arg2[%c0_9, %c0_10], %16 {strides = array<i32>} : memref<16x128xf32, #tpu.memory_space<vmem>>, vector<16x128xf32>,
    return
  }
}

</mosaic_0001>

<llo_original>
// kernel: mlp_forward.1
$region0: #{mlp_forward.1}
  #allocation0 [shape = 'u32[]', space=smem, size = 0x4, offset = 0x4, fixed_abs, tag = 'smem constant byte address 0x4 - core index']
  #allocation1 [shape = 'u32[144,128]{1,0:T(1,128)}', space=vmem, size = 0x12000, scoped, tag = 'internal scratch']
  %s0 = inlined_call_operand.vmem [shape: f32[16,128], index: 0, kind: input, shape index: {}]
  %s1 = inlined_call_operand.hbm [shape: f32[2,128,128], index: 1, kind: input, shape index: {}]
  %s2 = inlined_call_operand.vmem [shape: f32[16,128], index: 2, kind: output, shape index: {}]
  %s3 = sld [smem:[#allocation0]]
  $region22: #{mlp_forward.1} parent=0
    _
  %s5 = ssub.s32 1, %s3
  %s6 = scalar_select 0, %s5, %s3
  $region1: #{mlp_forward.1} parent=0
    #allocation2 [shape = 'u8[131072]{0}', space=vmem, size = 0x20000, scoped, tag = 'input window, operand 1, single buffered']
    #allocation3 [shape = 's32[1]{0}', space=sflag, size = 0x4, scoped, tag = 'scoped memory for mlp_forward.1']
    %7 = vsyncpa [#allocation3], 0
    // Predicated region
    $region2: #{mlp_forward.1} parent=1 // pred_check
      _
    $region3: #{mlp_forward.1} parent=1 // pred_check_branch
      %9 = sbr.rel (0) target = $region5
    $region4: #{mlp_forward.1} parent=1 // pred_region
      _
    $region5: #{mlp_forward.1} parent=1 // pred_fallthru
      _
    // Predicated region
    $region6: #{mlp_forward.1} parent=1 // pred_check
      _
    $region7: #{mlp_forward.1} parent=1 // pred_check_branch
      %11 = sbr.rel (0) target = $region9
    $region8: #{mlp_forward.1} parent=1 // pred_region
      %s13 = ssub.s32 4096, 4096
      %14 = vsyncadd [#allocation3], %s13
      %s15 = sshll.u32 [#allocation2], 4
      %s16 = int_to_ptr.vmem [resolvable:$true] %s15
      %21 = dma.hbm_to_vmem [thread:$0]  %s1, 4096, %s16, [#allocation3], 128, 128, 8
    $region9: #{mlp_forward.1} parent=1 // pred_fallthru
      _
    // Predicated region
    $region10: #{mlp_forward.1} parent=1 // pred_check
      _
    $region11: #{mlp_forward.1} parent=1 // pred_check_branch
      %23 = sbr.rel (0) target = $region13
    $region12: #{mlp_forward.1} parent=1 // pred_region
      %24 = dma.done [#allocation3], 4096
    $region13: #{mlp_forward.1} parent=1 // pred_fallthru
      _
    %v25 = vld [vmem:[%s0] sm:$0xff]
    %v26 = vld [vmem:[%s0 + $0x8] sm:$0xff]
    %v27 = vld [vmem:[#allocation2] sm:$0xff]
    %v28 = vld [vmem:[#allocation2 + $0x8] sm:$0xff]
    %v29 = vld [vmem:[#allocation2 + $0x10] sm:$0xff]
    %v30 = vld [vmem:[#allocation2 + $0x18] sm:$0xff]
    %v31 = vld [vmem:[#allocation2 + $0x20] sm:$0xff]
    %v32 = vld [vmem:[#allocation2 + $0x28] sm:$0xff]
    %v33 = vld [vmem:[#allocation2 + $0x30] sm:$0xff]
    %v34 = vld [vmem:[#allocation2 + $0x38] sm:$0xff]
    %v35 = vld [vmem:[#allocation2 + $0x40] sm:$0xff]
    %v36 = vld [vmem:[#allocation2 + $0x48] sm:$0xff]
    %v37 = vld [vmem:[#allocation2 + $0x50] sm:$0xff]
    %v38 = vld [vmem:[#allocation2 + $0x58] sm:$0xff]
    %v39 = vld [vmem:[#allocation2 + $0x60] sm:$0xff]
    %v40 = vld [vmem:[#allocation2 + $0x68] sm:$0xff]
    %v41 = vld [vmem:[#allocation2 + $0x70] sm:$0xff]
    %v42 = vld [vmem:[#allocation2 + $0x78] sm:$0xff]
    %s43 = scalar_lea.vmem [#allocation2], 128
    %v44 = vld [vmem:[%s43] sm:$0xff]
    %v45 = vld [vmem:[%s43 + $0x8] sm:$0xff]
    %v46 = vld [vmem:[%s43 + $0x10] sm:$0xff]
    %v47 = vld [vmem:[%s43 + $0x18] sm:$0xff]
    %v48 = vld [vmem:[%s43 + $0x20] sm:$0xff]
    %v49 = vld [vmem:[%s43 + $0x28] sm:$0xff]
    %v50 = vld [vmem:[%s43 + $0x30] sm:$0xff]
    %v51 = vld [vmem:[%s43 + $0x38] sm:$0xff]
    %v52 = vld [vmem:[%s43 + $0x40] sm:$0xff]
    %v53 = vld [vmem:[%s43 + $0x48] sm:$0xff]
    %v54 = vld [vmem:[%s43 + $0x50] sm:$0xff]
    %v55 = vld [vmem:[%s43 + $0x58] sm:$0xff]
    %v56 = vld [vmem:[%s43 + $0x60] sm:$0xff]
    %v57 = vld [vmem:[%s43 + $0x68] sm:$0xff]
    %v58 = vld [vmem:[%s43 + $0x70] sm:$0xff]
    %v59 = vld [vmem:[%s43 + $0x78] sm:$0xff]
    %60 = vmatprep.subr.mxu0 0.0
    %61 = vmatpush1.msra.mxu0 %v42
    %62 = vmatprep.subr.mxu0 0.0
    %63 = vmatpush1.msra.mxu0 %v41
    %64 = vmatprep.subr.mxu0 0.0
    %65 = vmatpush1.msra.mxu0 %v40
    %66 = vmatprep.subr.mxu0 0.0
    %67 = vmatpush1.msra.mxu0 %v39
    %68 = vmatprep.subr.mxu0 0.0
    %69 = vmatpush1.msra.mxu0 %v38
    %70 = vmatprep.subr.mxu0 0.0
    %71 = vmatpush1.msra.mxu0 %v37
    %72 = vmatprep.subr.mxu0 0.0
    %73 = vmatpush1.msra.mxu0 %v36
    %74 = vmatprep.subr.mxu0 0.0
    %75 = vmatpush1.msra.mxu0 %v35
    %76 = vmatprep.subr.mxu0 0.0
    %77 = vmatpush1.msra.mxu0 %v34
    %78 = vmatprep.subr.mxu0 0.0
    %79 = vmatpush1.msra.mxu0 %v33
    %80 = vmatprep.subr.mxu0 0.0
    %81 = vmatpush1.msra.mxu0 %v32
    %82 = vmatprep.subr.mxu0 0.0
    %83 = vmatpush1.msra.mxu0 %v31
    %84 = vmatprep.subr.mxu0 0.0
    %85 = vmatpush1.msra.mxu0 %v30
    %86 = vmatprep.subr.mxu0 0.0
    %87 = vmatpush1.msra.mxu0 %v29
    %88 = vmatprep.subr.mxu0 0.0
    %89 = vmatpush1.msra.mxu0 %v28
    %90 = vmatprep.subr.mxu0 0.0
    %91 = vmatpush1.msra.mxu0 %v27
    %92 = vmatprep.subr.mxu0 0.0
    %93 = vmatpush2.msra.mxu0 0.0
    %94 = vmatprep.subr.mxu0 0.0
    %95 = vmatpush2.msra.mxu0 0.0
    %96 = vmatprep.subr.mxu0 0.0
    %97 = vmatpush2.msra.mxu0 0.0
    %98 = vmatprep.subr.mxu0 0.0
    %99 = vmatpush2.msra.mxu0 0.0
    %100 = vmatprep.subr.mxu0 0.0
    %101 = vmatpush2.msra.mxu0 0.0
    %102 = vmatprep.subr.mxu0 0.0
    %103 = vmatpush2.msra.mxu0 0.0
    %104 = vmatprep.subr.mxu0 0.0
    %105 = vmatpush2.msra.mxu0 0.0
    %106 = vmatprep.subr.mxu0 0.0
    %107 = vmatpush2.msra.mxu0 0.0
    %108 = vmatprep.subr.mxu0 0.0
    %109 = vmatpush2.msra.mxu0 0.0
    %110 = vmatprep.subr.mxu0 0.0
    %111 = vmatpush2.msra.mxu0 0.0
    %112 = vmatprep.subr.mxu0 0.0
    %113 = vmatpush2.msra.mxu0 0.0
    %114 = vmatprep.subr.mxu0 0.0
    %115 = vmatpush2.msra.mxu0 0.0
    %116 = vmatprep.subr.mxu0 0.0
    %117 = vmatpush2.msra.mxu0 0.0
    %118 = vmatprep.subr.mxu0 0.0
    %119 = vmatpush2.msra.mxu0 0.0
    %120 = vmatprep.subr.mxu0 0.0
    %121 = vmatpush2.msra.mxu0 0.0
    %122 = vmatprep.subr.mxu0 0.0
    %123 = vmatpush2.msra.mxu0 0.0
    %124 = vmatprep.mubr.f32.mxu0 0.0
    %125 = vmatmul.mubr.f32.gmra.mxu0 %v25
    %v126 = vpop.f32.mrf.mxu0
    %v127 = vadd.f32 0.0, %v126
    %v128 = vpop.f32.mrf.mxu0
    %129 = vmatprep.mubr.f32.mxu0 0.0
    %130 = vmatmul.mubr.f32.gmra.mxu0 %v26
    %v131 = vpop.f32.mrf.mxu0
    %v132 = vadd.f32 0.0, %v131
    %v133 = vpop.f32.mrf.mxu0
    %134 = vdwg.mxu0
    %v135 = vxor.u32 %v127, 2147483648
    %v136 = vxor.u32 %v132, 2147483648
    %v137 = vmul.f32 %v135, 1.442695
    %v138 = vpow.pop %v137
    %v139 = vmul.f32 %v136, 1.442695
    %v140 = vpow.pop %v139
    %v141 = vadd.f32 %v138, 1.0
    %v142 = vadd.f32 %v140, 1.0
    %v143 = vrcp.pop %v141
    %v144 = vmul.f32 1.0, %v143
    %v145 = vrcp.pop %v142
    %v146 = vmul.f32 1.0, %v145
    %147 = vmatprep.subr.mxu0 0.0
    %148 = vmatpush1.msra.mxu0 %v59
    %149 = vmatprep.subr.mxu0 0.0
    %150 = vmatpush1.msra.mxu0 %v58
    %151 = vmatprep.subr.mxu0 0.0
    %152 = vmatpush1.msra.mxu0 %v57
    %153 = vmatprep.subr.mxu0 0.0
    %154 = vmatpush1.msra.mxu0 %v56
    %155 = vmatprep.subr.mxu0 0.0
    %156 = vmatpush1.msra.mxu0 %v55
    %157 = vmatprep.subr.mxu0 0.0
    %158 = vmatpush1.msra.mxu0 %v54
    %159 = vmatprep.subr.mxu0 0.0
    %160 = vmatpush1.msra.mxu0 %v53
    %161 = vmatprep.subr.mxu0 0.0
    %162 = vmatpush1.msra.mxu0 %v52
    %163 = vmatprep.subr.mxu0 0.0
    %164 = vmatpush1.msra.mxu0 %v51
    %165 = vmatprep.subr.mxu0 0.0
    %166 = vmatpush1.msra.mxu0 %v50
    %167 = vmatprep.subr.mxu0 0.0
    %168 = vmatpush1.msra.mxu0 %v49
    %169 = vmatprep.subr.mxu0 0.0
    %170 = vmatpush1.msra.mxu0 %v48
    %171 = vmatprep.subr.mxu0 0.0
    %172 = vmatpush1.msra.mxu0 %v47
    %173 = vmatprep.subr.mxu0 0.0
    %174 = vmatpush1.msra.mxu0 %v46
    %175 = vmatprep.subr.mxu0 0.0
    %176 = vmatpush1.msra.mxu0 %v45
    %177 = vmatprep.subr.mxu0 0.0
    %178 = vmatpush1.msra.mxu0 %v44
    %179 = vmatprep.subr.mxu0 0.0
    %180 = vmatpush2.msra.mxu0 0.0
    %181 = vmatprep.subr.mxu0 0.0
    %182 = vmatpush2.msra.mxu0 0.0
    %183 = vmatprep.subr.mxu0 0.0
    %184 = vmatpush2.msra.mxu0 0.0
    %185 = vmatprep.subr.mxu0 0.0
    %186 = vmatpush2.msra.mxu0 0.0
    %187 = vmatprep.subr.mxu0 0.0
    %188 = vmatpush2.msra.mxu0 0.0
    %189 = vmatprep.subr.mxu0 0.0
    %190 = vmatpush2.msra.mxu0 0.0
    %191 = vmatprep.subr.mxu0 0.0
    %192 = vmatpush2.msra.mxu0 0.0
    %193 = vmatprep.subr.mxu0 0.0
    %194 = vmatpush2.msra.mxu0 0.0
    %195 = vmatprep.subr.mxu0 0.0
    %196 = vmatpush2.msra.mxu0 0.0
    %197 = vmatprep.subr.mxu0 0.0
    %198 = vmatpush2.msra.mxu0 0.0
    %199 = vmatprep.subr.mxu0 0.0
    %200 = vmatpush2.msra.mxu0 0.0
    %201 = vmatprep.subr.mxu0 0.0
    %202 = vmatpush2.msra.mxu0 0.0
    %203 = vmatprep.subr.mxu0 0.0
    %204 = vmatpush2.msra.mxu0 0.0
    %205 = vmatprep.subr.mxu0 0.0
    %206 = vmatpush2.msra.mxu0 0.0
    %207 = vmatprep.subr.mxu0 0.0
    %208 = vmatpush2.msra.mxu0 0.0
    %209 = vmatprep.subr.mxu0 0.0
    %210 = vmatpush2.msra.mxu0 0.0
    %211 = vmatprep.mubr.f32.mxu0 0.0
    %212 = vmatmul.mubr.f32.gmra.mxu0 %v144
    %v213 = vpop.f32.mrf.mxu0
    %v214 = vadd.f32 0.0, %v213
    %v215 = vpop.f32.mrf.mxu0
    %216 = vmatprep.mubr.f32.mxu0 0.0
    %217 = vmatmul.mubr.f32.gmra.mxu0 %v146
    %v218 = vpop.f32.mrf.mxu0
    %v219 = vadd.f32 0.0, %v218
    %v220 = vpop.f32.mrf.mxu0
    %221 = vdwg.mxu0
    %v222 = vxor.u32 %v214, 2147483648
    %v223 = vxor.u32 %v219, 2147483648
    %v224 = vmul.f32 %v222, 1.442695
    %v225 = vpow.pop %v224
    %v226 = vmul.f32 %v223, 1.442695
    %v227 = vpow.pop %v226
    %v228 = vadd.f32 %v225, 1.0
    %v229 = vadd.f32 %v227, 1.0
    %v230 = vrcp.pop %v228
    %v231 = vmul.f32 1.0, %v230
    %v232 = vrcp.pop %v229
    %v233 = vmul.f32 1.0, %v232
    %234 = vst [vmem:[%s2] sm:$0xff] %v231
    %235 = vst [vmem:[%s2 + $0x8] sm:$0xff] %v233
    // Predicated region
    $region14: #{mlp_forward.1} parent=1 // pred_check
      _
    $region15: #{mlp_forward.1} parent=1 // pred_check_branch
      %237 = sbr.rel (0) target = $region17
    $region16: #{mlp_forward.1} parent=1 // pred_region
      _
    $region17: #{mlp_forward.1} parent=1 // pred_fallthru
      _
    // Predicated region
    $region18: #{mlp_forward.1} parent=1 // pred_check
      _
    $region19: #{mlp_forward.1} parent=1 // pred_check_branch
      %239 = sbr.rel (0) target = $region21
    $region20: #{mlp_forward.1} parent=1 // pred_region
      _
    $region21: #{mlp_forward.1} parent=1 // pred_fallthru
      _
    %240 = vsyncpa [#allocation3], 1

</llo_original>
